<compile_context>
chip_gen: v7x
topology: tpu7x:2x2x1
jax: 0.10.0
libtpu: 0.0.40
codegen_flags: <defaults>
</compile_context>

<pallas_src>
import jax
import jax.numpy as jnp
from jax import lax
from jax.experimental import pallas as pl
from jax.experimental.pallas import tpu as pltpu  # noqa: F401  (TPU backend)

block_size = 8     # T
n_embd = 32        # C
vocab_size = 65    # e.g. tiny-shakespeare char vocab


def _round_up(x, m):
    return ((x + m - 1) // m) * m


def bigram_kernel(idx_ref, fused_ref, pos_ref, out_ref):
    # idx_ref:   (BTp, 1)   int32  flattened token ids (row-padded to x8)
    # fused_ref: (Vp, Vp)   f32    tok_emb_table @ W.T  (vocab padded to x128)
    # pos_ref:   (BTp, Vp)  f32    pos_emb @ W.T + b, tiled over batch
    # out_ref:   (BTp, Vp)  f32    logits
    idx = idx_ref[...]                               # read the int tile once
    BTp = idx.shape[0]
    Vp = fused_ref.shape[0]

    # Token-embedding lookup + lm_head fused into a single one-hot matmul:
    # (BTp, Vp) @ (Vp, Vp).  Keep the one-hot float (MXU has no int path on v7x).
    iota_v = lax.broadcasted_iota(jnp.int32, (BTp, Vp), 1)
    one_hot = (idx == iota_v).astype(jnp.float32)    # (BTp, Vp)
    tok_logits = jnp.dot(one_hot, fused_ref[...],
                         preferred_element_type=jnp.float32)   # (BTp, Vp)

    # Positional logits (already include the lm_head bias).
    out_ref[...] = tok_logits + pos_ref[...]


def prepare_params(tok_tab, pos_tab, w, b, batch_size):
    """One-time (init-time) parameter prep.  Everything here is static per
    model + batch size and stays off the per-step hot path.

    tok_tab: (V, C)  pos_tab: (block_size, C)
    w: (V, C) PyTorch Linear layout   b: (V,) or (1, V)
    """
    V, C = tok_tab.shape
    T = pos_tab.shape[0]
    Vp = _round_up(V, 128)                 # 65 -> 128 (keep exactly 128)
    BT = batch_size * T
    BTp = _round_up(BT, 8)

    tok_tab = tok_tab.astype(jnp.float32)
    pos_tab = pos_tab.astype(jnp.float32)
    w = w.astype(jnp.float32)
    b = b.astype(jnp.float32).reshape(1, V)

    # fused_table[i, :] = tok_emb(i) @ W.T, zero for padded vocab rows/cols.
    tok_tab_p = jnp.zeros((Vp, C), jnp.float32).at[:V].set(tok_tab)
    w_t_p = jnp.zeros((C, Vp), jnp.float32).at[:, :V].set(w.T)
    fused_table = tok_tab_p @ w_t_p                               # (Vp, Vp)

    # pos_logits[t, :] = pos_emb(t) @ W.T + b  (bias folded in here).
    pos_logits = pos_tab @ w.T + b                                # (T, V)
    pos_logits_p = jnp.zeros((T, Vp), jnp.float32).at[:, :V].set(pos_logits)
    pos_logits_tiled = jnp.tile(pos_logits_p, (batch_size, 1))    # (BT, Vp)
    if BTp != BT:
        pos_logits_tiled = jnp.concatenate(
            [pos_logits_tiled, jnp.zeros((BTp - BT, Vp), jnp.float32)], axis=0)

    # Materialize now so nothing constant-folds back into the per-call trace.
    fused_table, pos_logits_tiled = jax.block_until_ready(
        (fused_table, pos_logits_tiled))

    return {
        "fused_table": fused_table,
        "pos_logits_tiled": pos_logits_tiled,
        "V": V, "Vp": Vp, "T": T, "BT": BT, "BTp": BTp,
    }


def bigram_forward(idx, params):
    """idx: (B, T) int32.  Returns logits (B, T, V) f32."""
    B, T = idx.shape
    V, Vp = params["V"], params["Vp"]
    BT, BTp = params["BT"], params["BTp"]
    assert T == params["T"] and B * T == BT, "batch/time must match prepare_params"

    idx2d = idx.reshape(BT, 1).astype(jnp.int32)
    if BTp != BT:   # never taken when B*T is 8-aligned (keeps hot path clean)
        idx2d = jnp.concatenate(
            [idx2d, jnp.zeros((BTp - BT, 1), jnp.int32)], axis=0)

    logits2d = pl.pallas_call(
        bigram_kernel,
        out_shape=jax.ShapeDtypeStruct((BTp, Vp), jnp.float32),
        in_specs=[
            pl.BlockSpec((BTp, 1), lambda: (0, 0)),
            pl.BlockSpec((Vp, Vp), lambda: (0, 0)),
            pl.BlockSpec((BTp, Vp), lambda: (0, 0)),
        ],
        out_specs=pl.BlockSpec((BTp, Vp), lambda: (0, 0)),
    )(idx2d, params["fused_table"], params["pos_logits_tiled"])

    # Slice off row/vocab padding and restore (B, T, V).
    return logits2d[:BT, :V].reshape(B, T, V)


def reference_forward(idx, tok_tab, pos_tab, w, b):
    tok_emb = tok_tab[idx]                       # (B, T, C)
    pos_emb = pos_tab[jnp.arange(idx.shape[1])]  # (T, C)
    x = tok_emb + pos_emb[None]
    return x @ w.T + b.reshape(1, -1)            # (B, T, V)


if __name__ == "__main__":
    key = jax.random.PRNGKey(0)
    k_idx, k_tok, k_pos, k_w, k_b = jax.random.split(key, 5)

    B, T = 2, block_size

    idx = jax.random.randint(k_idx, (B, T), 0, vocab_size, dtype=jnp.int32)
    tok_tab = jax.random.normal(k_tok, (vocab_size, n_embd), jnp.float32) * 0.02
    pos_tab = jax.random.normal(k_pos, (block_size, n_embd), jnp.float32) * 0.02
    w = jax.random.normal(k_w, (vocab_size, n_embd), jnp.float32) * 0.02
    b = jax.random.normal(k_b, (1, vocab_size), jnp.float32) * 0.02

    # One-time prep (off the per-step path).
    params = prepare_params(tok_tab, pos_tab, w, b, batch_size=B)

    logits = bigram_forward(idx, params)
    jax.block_until_ready(logits)

    ref = reference_forward(idx, tok_tab, pos_tab, w, b)
    assert logits.shape == (B, T, vocab_size)
    # Fused-table fold reorders the sum (tok@W.T + pos@W.T vs (tok+pos)@W.T):
    # perturbation is ~1e-7, well inside 1e-5.
    assert jnp.allclose(logits, ref, atol=1e-5, rtol=1e-5)

    # TODO(synk): cross-entropy loss branch (targets != None) and generate()
    # multinomial sampling loop are not kernelized; PyTorch forward with
    # targets=None returns (logits, None) — only the logits path is here.
    # TODO(synk): bf16 MXU operands (and a (rows, Vp) grid with
    # dimension_semantics=("parallel",) for v7x's 2 TensorCores) are the next
    # wins once B*T / vocab grow beyond toy size; skipped to keep the 1e-5
    # numerical check tight and avoid per-grid-step overhead at BT=16.
    print("KERNEL_OK")
</pallas_src>

<mosaic_0001>
module attributes {stable_mosaic.version = 11 : i64} {
  func.func @bigram_kernel(%arg0: memref<16x1xi32, #tpu.memory_space<vmem>>, %arg1: memref<128x128xf32, #tpu.memory_space<vmem>>, %arg2: memref<16x128xf32, #tpu.memory_space<vmem>>, %arg3: memref<16x128xf32, #tpu.memory_space<vmem>>) attributes {dimension_semantics = [], scalar_prefetch = 0 : i64, scratch_operands = 0 : i64, tpu.core_type = #tpu.core_type<tc>} {
    %c0 = arith.constant 0 : index
    %c0_0 = arith.constant 0 : index
    %0 = vector.load %arg0[%c0, %c0_0] : memref<16x1xi32, #tpu.memory_space<vmem>>, vector<16x1xi32>
    %1 = tpu.iota {dimensions = array<i32: 1>} : vector<16x128xi32>
    %2 = vector.broadcast %0 : vector<16x1xi32> to vector<16x128xi32>
    %3 = arith.cmpi eq, %2, %1 : vector<16x128xi32>
    %4 = arith.extui %3 : vector<16x128xi1> to vector<16x128xi32>
    %5 = arith.sitofp %4 : vector<16x128xi32> to vector<16x128xf32>
    %c0_1 = arith.constant 0 : index
    %c0_2 = arith.constant 0 : index
    %6 = vector.load %arg1[%c0_1, %c0_2] : memref<128x128xf32, #tpu.memory_space<vmem>>, vector<128x128xf32>
    %cst = arith.constant dense<0.000000e+00> : vector<16x128xf32>
    %7 = tpu.matmul %5, %6, %cst {dimension_numbers = #tpu.dot_dimension_numbers<[1], [0], [0], [1], [0, 0, 1, 1], [], []>} : vector<16x128xf32>, vector<128x128xf32>, vector<16x128xf32> -> vector<16x128xf32>
    %c0_3 = arith.constant 0 : index
    %c0_4 = arith.constant 0 : index
    %8 = vector.load %arg2[%c0_3, %c0_4] : memref<16x128xf32, #tpu.memory_space<vmem>>, vector<16x128xf32>
    %9 = arith.addf %7, %8 : vector<16x128xf32>
    %c0_5 = arith.constant 0 : index
    %c0_6 = arith.constant 0 : index
    %10 = vector.load %arg3[%c0_5, %c0_6] : memref<16x128xf32, #tpu.memory_space<vmem>>, vector<16x128xf32>
    tpu.vector_store %arg3[%c0_5, %c0_6], %9 {strides = array<i32>} : memref<16x128xf32, #tpu.memory_space<vmem>>, vector<16x128xf32>,
    return
  }
}

</mosaic_0001>

<llo_original>
// kernel: tpu_custom_call.1
$region0: #{tpu_custom_call.1}
  #allocation0 [shape = 'u32[]', space=smem, size = 0x4, offset = 0x4, fixed_abs, tag = 'smem constant byte address 0x4 - core index']
  #allocation1 [shape = 'u32[144,128]{1,0:T(1,128)}', space=vmem, size = 0x12000, scoped, tag = 'internal scratch']
  %s0 = inlined_call_operand.vmem [shape: s32[16,1], index: 0, kind: input, shape index: {}]
  %s1 = inlined_call_operand.hbm [shape: f32[128,128], index: 1, kind: input, shape index: {}]
  %s2 = inlined_call_operand.vmem [shape: f32[16,128], index: 2, kind: input, shape index: {}]
  %s3 = inlined_call_operand.hbm [shape: f32[16,128], index: 3, kind: output, shape index: {}]
  %s4 = sld [smem:[#allocation0]]
  $region26: #{tpu_custom_call.1} parent=0
    _
  %s6 = ssub.s32 1, %s4
  %s7 = scalar_select 0, %s6, %s4
  $region1: #{tpu_custom_call.1} parent=0
    #allocation2 [shape = 'u8[65536]{0}', space=vmem, size = 0x10000, scoped, tag = 'input window, operand 1, single buffered']
    #allocation3 [shape = 's32[1]{0}', space=sflag, size = 0x4, scoped, tag = 'scoped memory for tpu_custom_call.1']
    #allocation4 [shape = 's32[1]{0}', space=sflag, size = 0x4, scoped, tag = 'scoped memory for tpu_custom_call.1']
    #allocation5 [shape = 'u8[8192]{0}', space=vmem, size = 0x2000, scoped, tag = 'output window, operand 0, single buffered']
    %8 = vsyncpa [#allocation3], 0
    %9 = vsyncpa [#allocation4], 0
    // Predicated region
    $region2: #{tpu_custom_call.1} parent=1 // pred_check
      _
    $region3: #{tpu_custom_call.1} parent=1 // pred_check_branch
      %11 = sbr.rel (0) target = $region5
    $region4: #{tpu_custom_call.1} parent=1 // pred_region
      _
    $region5: #{tpu_custom_call.1} parent=1 // pred_fallthru
      _
    // Predicated region
    $region6: #{tpu_custom_call.1} parent=1 // pred_check
      _
    $region7: #{tpu_custom_call.1} parent=1 // pred_check_branch
      %13 = sbr.rel (0) target = $region9
    $region8: #{tpu_custom_call.1} parent=1 // pred_region
      %s15 = ssub.s32 2048, 2048
      %16 = vsyncadd [#allocation3], %s15
      %s17 = sshll.u32 [#allocation2], 4
      %s18 = int_to_ptr.vmem [resolvable:$true] %s17
      %23 = dma.hbm_to_vmem [thread:$0]  %s1, 2048, %s18, [#allocation3], 128, 128, 8
    $region9: #{tpu_custom_call.1} parent=1 // pred_fallthru
      _
    // Predicated region
    $region10: #{tpu_custom_call.1} parent=1 // pred_check
      _
    $region11: #{tpu_custom_call.1} parent=1 // pred_check_branch
      %25 = sbr.rel (0) target = $region13
    $region12: #{tpu_custom_call.1} parent=1 // pred_region
      _
    $region13: #{tpu_custom_call.1} parent=1 // pred_fallthru
      _
    // Predicated region
    $region14: #{tpu_custom_call.1} parent=1 // pred_check
      _
    $region15: #{tpu_custom_call.1} parent=1 // pred_check_branch
      %27 = sbr.rel (0) target = $region17
    $region16: #{tpu_custom_call.1} parent=1 // pred_region
      %28 = dma.done [#allocation3], 2048
    $region17: #{tpu_custom_call.1} parent=1 // pred_fallthru
      _
    %v29 = vld [vmem:[%s0] sm:$0xff]
    %v30 = vld [vmem:[%s0 + $0x8] sm:$0xff]
    %v31 = vlaneseq
    %v32 = vand.u32 %v31, 127
    %33 = vset.pattern.permute.xlu0 0
    %34 = vperm.xlu0 %33, %v29
    %v35 = vpop.permute.xlu0 %34
    %36 = vset.pattern.permute.xlu0 0
    %37 = vperm.xlu0 %36, %v30
    %v38 = vpop.permute.xlu0 %37
    %vm39 = vcmp.eq.s32.totalorder %v35, %v32
    %vm40 = vcmp.eq.s32.totalorder %v38, %v32
    %v41 = vsel %vm39, 1, 0
    %v42 = vsel %vm40, 1, 0
    %v43 = vcvt.s32.f32 %v41
    %v44 = vcvt.s32.f32 %v42
    %v45 = vld [vmem:[#allocation2] sm:$0xff]
    %v46 = vld [vmem:[#allocation2 + $0x8] sm:$0xff]
    %v47 = vld [vmem:[#allocation2 + $0x10] sm:$0xff]
    %v48 = vld [vmem:[#allocation2 + $0x18] sm:$0xff]
    %v49 = vld [vmem:[#allocation2 + $0x20] sm:$0xff]
    %v50 = vld [vmem:[#allocation2 + $0x28] sm:$0xff]
    %v51 = vld [vmem:[#allocation2 + $0x30] sm:$0xff]
    %v52 = vld [vmem:[#allocation2 + $0x38] sm:$0xff]
    %v53 = vld [vmem:[#allocation2 + $0x40] sm:$0xff]
    %v54 = vld [vmem:[#allocation2 + $0x48] sm:$0xff]
    %v55 = vld [vmem:[#allocation2 + $0x50] sm:$0xff]
    %v56 = vld [vmem:[#allocation2 + $0x58] sm:$0xff]
    %v57 = vld [vmem:[#allocation2 + $0x60] sm:$0xff]
    %v58 = vld [vmem:[#allocation2 + $0x68] sm:$0xff]
    %v59 = vld [vmem:[#allocation2 + $0x70] sm:$0xff]
    %v60 = vld [vmem:[#allocation2 + $0x78] sm:$0xff]
    %v61 = vld [vmem:[%s2] sm:$0xff]
    %v62 = vld [vmem:[%s2 + $0x8] sm:$0xff]
    %63 = vmatprep.subr.mxu0 0.0
    %64 = vmatpush1.msra.mxu0 %v45
    %65 = vmatprep.subr.mxu0 0.0
    %66 = vmatpush1.msra.mxu0 %v46
    %67 = vmatprep.subr.mxu0 0.0
    %68 = vmatpush1.msra.mxu0 %v47
    %69 = vmatprep.subr.mxu0 0.0
    %70 = vmatpush1.msra.mxu0 %v48
    %71 = vmatprep.subr.mxu0 0.0
    %72 = vmatpush1.msra.mxu0 %v49
    %73 = vmatprep.subr.mxu0 0.0
    %74 = vmatpush1.msra.mxu0 %v50
    %75 = vmatprep.subr.mxu0 0.0
    %76 = vmatpush1.msra.mxu0 %v51
    %77 = vmatprep.subr.mxu0 0.0
    %78 = vmatpush1.msra.mxu0 %v52
    %79 = vmatprep.subr.mxu0 0.0
    %80 = vmatpush1.msra.mxu0 %v53
    %81 = vmatprep.subr.mxu0 0.0
    %82 = vmatpush1.msra.mxu0 %v54
    %83 = vmatprep.subr.mxu0 0.0
    %84 = vmatpush1.msra.mxu0 %v55
    %85 = vmatprep.subr.mxu0 0.0
    %86 = vmatpush1.msra.mxu0 %v56
    %87 = vmatprep.subr.mxu0 0.0
    %88 = vmatpush1.msra.mxu0 %v57
    %89 = vmatprep.subr.mxu0 0.0
    %90 = vmatpush1.msra.mxu0 %v58
    %91 = vmatprep.subr.mxu0 0.0
    %92 = vmatpush1.msra.mxu0 %v59
    %93 = vmatprep.subr.mxu0 0.0
    %94 = vmatpush1.msra.mxu0 %v60
    %95 = vmatprep.subr.mxu0 0.0
    %96 = vmatpush1.msra.mxu0 0.0
    %97 = vmatprep.subr.mxu0 0.0
    %98 = vmatpush1.msra.mxu0 0.0
    %99 = vmatprep.subr.mxu0 0.0
    %100 = vmatpush1.msra.mxu0 0.0
    %101 = vmatprep.subr.mxu0 0.0
    %102 = vmatpush1.msra.mxu0 0.0
    %103 = vmatprep.subr.mxu0 0.0
    %104 = vmatpush1.msra.mxu0 0.0
    %105 = vmatprep.subr.mxu0 0.0
    %106 = vmatpush1.msra.mxu0 0.0
    %107 = vmatprep.subr.mxu0 0.0
    %108 = vmatpush1.msra.mxu0 0.0
    %109 = vmatprep.subr.mxu0 0.0
    %110 = vmatpush1.msra.mxu0 0.0
    %111 = vmatprep.subr.mxu0 0.0
    %112 = vmatpush1.msra.mxu0 0.0
    %113 = vmatprep.subr.mxu0 0.0
    %114 = vmatpush1.msra.mxu0 0.0
    %115 = vmatprep.subr.mxu0 0.0
    %116 = vmatpush1.msra.mxu0 0.0
    %117 = vmatprep.subr.mxu0 0.0
    %118 = vmatpush1.msra.mxu0 0.0
    %119 = vmatprep.subr.mxu0 0.0
    %120 = vmatpush1.msra.mxu0 0.0
    %121 = vmatprep.subr.mxu0 0.0
    %122 = vmatpush1.msra.mxu0 0.0
    %123 = vmatprep.subr.mxu0 0.0
    %124 = vmatpush1.msra.mxu0 0.0
    %125 = vmatprep.subr.mxu0 0.0
    %126 = vmatpush1.msra.mxu0 0.0
    %127 = vmatprep.mubr.f32.mxu0 0.0
    %128 = vmatmul.mubr.f32.gmra.mrb[0].mxu0 %v43
    %v129 = vpop.f32.mrb[0].mxu0
    %v130 = vadd.f32 %v61, %v129
    %v131 = vpop.f32.mrb[0].mxu0
    %132 = vmatprep.mubr.f32.mxu0 0.0
    %133 = vmatmul.mubr.f32.gmra.mrb[0].mxu0 %v44
    %v134 = vpop.f32.mrb[0].mxu0
    %v135 = vadd.f32 %v62, %v134
    %v136 = vpop.f32.mrb[0].mxu0
    %137 = vdwg.mxu0
    %138 = vst [vmem:[#allocation5] sm:$0xff] %v130
    %139 = vst [vmem:[#allocation5 + $0x8] sm:$0xff] %v135
    // Predicated region
    $region18: #{tpu_custom_call.1} parent=1 // pred_check
      _
    $region19: #{tpu_custom_call.1} parent=1 // pred_check_branch
      %141 = sbr.rel (0) target = $region21
    $region20: #{tpu_custom_call.1} parent=1 // pred_region
      %s143 = ssub.s32 256, 256
      %144 = vsyncadd [#allocation4], %s143
      %s145 = sshll.u32 [#allocation5], 4
      %s146 = int_to_ptr.vmem [resolvable:$true] %s145
      %151 = dma.vmem_to_hbm [thread:$0]  %s146, 256, %s3, [#allocation4], 128, 128, 8
    $region21: #{tpu_custom_call.1} parent=1 // pred_fallthru
      _
    // Predicated region
    $region22: #{tpu_custom_call.1} parent=1 // pred_check
      _
    $region23: #{tpu_custom_call.1} parent=1 // pred_check_branch
      %153 = sbr.rel (0) target = $region25
    $region24: #{tpu_custom_call.1} parent=1 // pred_region
      %154 = dma.done [#allocation4], 256
    $region25: #{tpu_custom_call.1} parent=1 // pred_fallthru
      _
    %155 = vsyncpa [#allocation3], 1
    %156 = vsyncpa [#allocation4], 1

</llo_original>
